<compile_context>
chip_gen: v6e
topology: v6e:2x2x1
jax: 0.10.0
libtpu: 0.0.40
codegen_flags: <defaults>
</compile_context>

<pallas_src>
import functools
import math

import jax
import jax.numpy as jnp
from jax.experimental import pallas as pl
from jax.experimental.pallas import tpu as pltpu


def _label_smoothing_kernel(tgt_ref, x_ref, o_ref, *, eps, confidence,
                            bblk, ts, tv, sg):
    j = pl.program_id(2)                          # vocab-tile (reduction) index

    @pl.when(j == 0)
    def _():
        o_ref[0, 0, :, :] = jnp.zeros((8, 128), jnp.float32)

    base = j * tv                                 # global column offset of this vocab tile
    conf_f = jnp.float32(confidence)
    eps_f = jnp.float32(eps)
    zero_f = jnp.float32(0.0)

    # (sg, 128) lane iota, hoisted out of all loops (1-2 vregs live).
    lane = jax.lax.broadcasted_iota(jnp.int32, (sg, 128), 1)

    # Two independent accumulators to shorten the add dependence chain.
    acc0 = jnp.zeros((8, 128), jnp.float32)
    acc1 = jnp.zeros((8, 128), jnp.float32)

    n_groups = ts // sg
    n_chunks = tv // 128
    for si in range(n_groups):
        r0 = si * sg
        tgt_g = tgt_ref[r0:r0 + sg, :]                        # (sg, 1) int32
        # Per-row smoothing weight; padding rows (target == 0) are fully zeroed.
        eps_g = jnp.where(tgt_g == 0, zero_f, eps_f)          # (sg, 1) f32
        for vi in range(n_chunks):
            c0 = vi * 128
            # Label-smoothed weights for this (sg,128) strip (targets only, no batch dep).
            w = jnp.where(lane == (tgt_g - (base + c0)), conf_f, eps_g)
            if vi == 0:
                # true_dist[:, 0] = 0 : global column 0 lives in chunk 0 of vocab
                # tile j == 0; for j > 0 this compare matches nothing (no-op) and
                # it is statically skipped for every other chunk.
                w = jnp.where(lane == (0 - base), zero_f, w)
            # Sum the batch sub-block first so the mask multiply is amortized over bblk.
            xs = x_ref[0, r0:r0 + sg, c0:c0 + 128].astype(jnp.float32)
            for b in range(1, bblk):
                xs = xs + x_ref[b, r0:r0 + sg, c0:c0 + 128].astype(jnp.float32)
            wx = w * xs                                       # (sg, 128) f32
            part = wx[0:8, :]
            for k in range(1, sg // 8):
                part = part + wx[k * 8:(k + 1) * 8, :]
            if (si * n_chunks + vi) % 2 == 0:
                acc0 = acc0 + part
            else:
                acc1 = acc1 + part

    o_ref[0, 0, :, :] += acc0 + acc1


def _pick_tile(dim, unit, max_tile):
    """Largest multiple of `unit` that divides `dim` and is <= max_tile."""
    best = unit
    t = unit
    while t <= min(dim, max_tile):
        if dim % t == 0:
            best = t
        t += unit
    return best


def _pick_batch_block(B, n_s, cap=4):
    """Largest divisor of B <= cap that keeps >= 2 parallel grid blocks (v7x megacore)."""
    best = 1
    for c in range(1, min(B, cap) + 1):
        if B % c == 0 and (c == 1 or (B // c) * n_s >= 2):
            best = c
    return best


def label_smoothing_loss(x, target_sequence, smoothing=0.0, *,
                         tile_s=None, tile_v=None, batch_block=None,
                         block_bytes=4 * 1024 * 1024):
    """x: (B, S, V) log-probs (f32 or bf16); target_sequence: (S,) int indices."""
    B, S, V = x.shape
    confidence = 1.0 - smoothing
    eps = smoothing / (V - 2)        # mirrors the PyTorch module (no V == 2 guard)

    itemsize = jnp.dtype(x.dtype).itemsize
    sub = 8 if itemsize >= 4 else 16          # sub-32-bit tiles need second-minor % 16
    if S % sub != 0 or V % 128 != 0:
        raise ValueError(f"requires S % {sub} == 0 and V % 128 == 0 for dtype {x.dtype}")

    ts = tile_s if tile_s is not None else _pick_tile(S, sub, 256)
    if S % ts != 0 or ts % sub != 0:
        raise ValueError(f"tile_s must divide S and be a multiple of {sub}")
    n_s = S // ts

    bblk = batch_block if batch_block is not None else _pick_batch_block(B, n_s)
    if B % bblk != 0:
        raise ValueError("batch_block must divide B")

    max_tv = max(128, min(4096, (block_bytes // (bblk * ts * itemsize)) // 128 * 128))
    tv = tile_v if tile_v is not None else _pick_tile(V, 128, max_tv)
    if V % tv != 0 or tv % 128 != 0:
        raise ValueError("tile_v must divide V and be a multiple of 128")

    sg = 16 if ts % 16 == 0 else 8            # sublane-group size for the strip loop

    tgt2d = target_sequence.astype(jnp.int32).reshape(S, 1)

    kernel = functools.partial(
        _label_smoothing_kernel,
        eps=float(eps), confidence=float(confidence),
        bblk=bblk, ts=ts, tv=tv, sg=sg)

    partials = pl.pallas_call(
        kernel,
        out_shape=jax.ShapeDtypeStruct((B // bblk, n_s, 8, 128), jnp.float32),
        grid=(B // bblk, n_s, V // tv),
        in_specs=[
            pl.BlockSpec((ts, 1), lambda b, i, j: (i, 0)),         # targets (reused over b, j)
            pl.BlockSpec((bblk, ts, tv), lambda b, i, j: (b, i, j)),  # x tile, streamed as-is
        ],
        out_specs=pl.BlockSpec((1, 1, 8, 128), lambda b, i, j: (b, i, 0, 0)),
        compiler_params=pltpu.CompilerParams(
            dimension_semantics=("parallel", "parallel", "arbitrary"),
            vmem_limit_bytes=32 * 1024 * 1024),
    )(tgt2d, x)

    # sum_{b,s,v} td * x  (disjoint per-(batch-block, seq-tile) partials summed here)
    cross = jnp.sum(partials)

    # Batch-invariant constant term B * n_valid * sum_{td>0} td*log(td): only two
    # distinct positive td values exist, so this is exact closed form.
    def _xlogx(v):
        return v * math.log(v) if v > 0.0 else 0.0

    const_per_row = _xlogx(confidence) + (V - 2) * _xlogx(eps)
    n_valid = jnp.sum((target_sequence != 0).astype(jnp.float32))
    return jnp.float32(B) * n_valid * jnp.float32(const_per_row) - cross
    # TODO(synk): the PyTorch module's debug print and `self.true_dist` caching
    # (stateful side effects) are intentionally not reproduced.


def _reference_loss(x, target_sequence, smoothing):
    # Pure-JAX reference mirroring the PyTorch code path.
    B, S, V = x.shape
    confidence = 1.0 - smoothing
    eps = smoothing / (V - 2)
    tgt = target_sequence.astype(jnp.int32)
    v_idx = jnp.arange(V)[None, :]
    td = jnp.where(v_idx == tgt[:, None], confidence, eps)
    td = td.at[:, 0].set(0.0)
    td = jnp.where(tgt[:, None] == 0, 0.0, td)
    safe_td = jnp.where(td > 0, td, 1.0)
    kl = jnp.where(td[None] > 0, td[None] * (jnp.log(safe_td)[None] - x), 0.0)
    return jnp.sum(kl)


if __name__ == "__main__":
    B, S, V = 2, 16, 512
    smoothing = 0.1

    key = jax.random.PRNGKey(0)
    k_x, k_t = jax.random.split(key)

    logits = jax.random.normal(k_x, (B, S, V), dtype=jnp.float32)
    x = jax.nn.log_softmax(logits, axis=-1)               # model output: log-probabilities

    target = jax.random.randint(k_t, (S,), 0, V, dtype=jnp.int32)
    target = target.at[0].set(0)                          # include padding tokens (index 0)
    target = target.at[5].set(0)

    ref = _reference_loss(x, target, smoothing)

    # Config 1: small tiles exercising the full (batch-block, seq, vocab) grid,
    # multi-chunk lane loop, batch-block amortization, and cross-j accumulation.
    loss1 = label_smoothing_loss(x, target, smoothing=smoothing,
                                 tile_s=8, tile_v=256, batch_block=2)
    loss1 = jax.block_until_ready(loss1)
    assert jnp.allclose(loss1, ref, rtol=1e-4, atol=1e-3), (loss1, ref)

    # Config 2: sg=16 path, grid over batch (bblk=1), single vocab tile.
    loss2 = label_smoothing_loss(x, target, smoothing=smoothing,
                                 tile_s=16, tile_v=512, batch_block=1)
    loss2 = jax.block_until_ready(loss2)
    assert jnp.allclose(loss2, ref, rtol=1e-4, atol=1e-3), (loss2, ref)

    # Config 3: bf16 streaming path (upcast per strip inside the kernel).
    x_bf16 = x.astype(jnp.bfloat16)
    ref_bf16 = _reference_loss(x_bf16.astype(jnp.float32), target, smoothing)
    loss3 = label_smoothing_loss(x_bf16, target, smoothing=smoothing,
                                 tile_s=16, tile_v=256, batch_block=2)
    loss3 = jax.block_until_ready(loss3)
    assert jnp.allclose(loss3, ref_bf16, rtol=1e-3, atol=1e-2), (loss3, ref_bf16)

    print("KERNEL_OK")
</pallas_src>

<mosaic_0001>
module attributes {stable_mosaic.version = 11 : i64} {
  func.func @_label_smoothing_kernel(%arg0: i32, %arg1: i32, %arg2: i32, %arg3: memref<8x1xi32, #tpu.memory_space<vmem>>, %arg4: memref<2x8x256xf32, #tpu.memory_space<vmem>>, %arg5: memref<1x1x8x128xf32, #tpu.memory_space<vmem>>) attributes {dimension_semantics = [#tpu.dimension_semantics<parallel>, #tpu.dimension_semantics<parallel>, #tpu.dimension_semantics<arbitrary>], iteration_bounds = array<i64: 1, 2, 2>, scalar_prefetch = 0 : i64, scratch_operands = 0 : i64, tpu.core_type = #tpu.core_type<tc>, window_params = [{transform_indices = @transform_0, window_bounds = array<i64: 8, 1>}, {transform_indices = @transform_1, window_bounds = array<i64: 2, 8, 256>}, {transform_indices = @transform_2, window_bounds = array<i64: 1, 1, 8, 128>}]} {
    %c0_i32 = arith.constant 0 : i32
    %0 = arith.cmpi eq, %arg2, %c0_i32 : i32
    %1 = arith.extui %0 : i1 to i32
    %c0_i32_0 = arith.constant 0 : i32
    %2 = arith.cmpi ne, %1, %c0_i32_0 : i32
    scf.if %2 {
      %cst_29 = arith.constant 0.000000e+00 : f32
      %57 = vector.broadcast %cst_29 : f32 to vector<8x128xf32>
      %c0_30 = arith.constant 0 : index
      %c0_31 = arith.constant 0 : index
      %c0_32 = arith.constant 0 : index
      %c0_33 = arith.constant 0 : index
      %58 = vector.load %arg5[%c0_30, %c0_31, %c0_32, %c0_33] : memref<1x1x8x128xf32, #tpu.memory_space<vmem>>, vector<1x1x8x128xf32>
      %59 = vector.shape_cast %58 : vector<1x1x8x128xf32> to vector<8x128xf32>
      %60 = vector.shape_cast %57 : vector<8x128xf32> to vector<1x1x8x128xf32>
      tpu.vector_store %arg5[%c0_30, %c0_31, %c0_32, %c0_33], %60 {strides = array<i32>} : memref<1x1x8x128xf32, #tpu.memory_space<vmem>>, vector<1x1x8x128xf32>,
    } else {
    }
    %c256_i32 = arith.constant 256 : i32
    %3 = arith.muli %arg2, %c256_i32 : i32
    %4 = tpu.iota {dimensions = array<i32: 1>} : vector<8x128xi32>
    %cst = arith.constant 0.000000e+00 : f32
    %5 = vector.broadcast %cst : f32 to vector<8x128xf32>
    %cst_1 = arith.constant 0.000000e+00 : f32
    %6 = vector.broadcast %cst_1 : f32 to vector<8x128xf32>
    %c0 = arith.constant 0 : index
    %c0_2 = arith.constant 0 : index
    %7 = vector.load %arg3[%c0, %c0_2] : memref<8x1xi32, #tpu.memory_space<vmem>>, vector<8x1xi32>
    %c0_i32_3 = arith.constant 0 : i32
    %8 = vector.broadcast %c0_i32_3 : i32 to vector<8x1xi32>
    %9 = arith.cmpi eq, %7, %8 : vector<8x1xi32>
    %cst_4 = arith.constant 0.000000e+00 : f32
    %cst_5 = arith.constant 1.96078428E-4 : f32
    %10 = vector.broadcast %cst_4 : f32 to vector<8x1xf32>
    %11 = vector.broadcast %cst_5 : f32 to vector<8x1xf32>
    %12 = arith.select %9, %10, %11 : vector<8x1xi1>, vector<8x1xf32>
    %c0_i32_6 = arith.constant 0 : i32
    %13 = arith.addi %3, %c0_i32_6 : i32
    %14 = vector.broadcast %13 : i32 to vector<8x1xi32>
    %15 = arith.subi %7, %14 : vector<8x1xi32>
    %16 = vector.broadcast %15 : vector<8x1xi32> to vector<8x128xi32>
    %17 = arith.cmpi eq, %4, %16 : vector<8x128xi32>
    %cst_7 = arith.constant 0.899999976 : f32
    %18 = vector.broadcast %cst_7 : f32 to vector<8x128xf32>
    %19 = vector.shape_cast %12 : vector<8x1xf32> to vector<8x1xf32>
    %20 = vector.broadcast %19 : vector<8x1xf32> to vector<8x128xf32>
    %21 = arith.select %17, %18, %20 : vector<8x128xi1>, vector<8x128xf32>
    %c0_i32_8 = arith.constant 0 : i32
    %22 = arith.subi %c0_i32_8, %3 : i32
    %23 = vector.broadcast %22 : i32 to vector<8x128xi32>
    %24 = arith.cmpi eq, %4, %23 : vector<8x128xi32>
    %cst_9 = arith.constant 0.000000e+00 : f32
    %25 = vector.broadcast %cst_9 : f32 to vector<8x128xf32>
    %26 = arith.select %24, %25, %21 : vector<8x128xi1>, vector<8x128xf32>
    %c0_10 = arith.constant 0 : index
    %c0_11 = arith.constant 0 : index
    %c0_12 = arith.constant 0 : index
    %27 = vector.load %arg4[%c0_10, %c0_11, %c0_12] : memref<2x8x256xf32, #tpu.memory_space<vmem>>, vector<1x8x128xf32>
    %28 = vector.shape_cast %27 : vector<1x8x128xf32> to vector<8x128xf32>
    %c1 = arith.constant 1 : index
    %c0_13 = arith.constant 0 : index
    %c0_14 = arith.constant 0 : index
    %29 = vector.load %arg4[%c1, %c0_13, %c0_14] : memref<2x8x256xf32, #tpu.memory_space<vmem>>, vector<1x8x128xf32>
    %30 = vector.shape_cast %29 : vector<1x8x128xf32> to vector<8x128xf32>
    %31 = arith.addf %28, %30 : vector<8x128xf32>
    %32 = arith.mulf %26, %31 : vector<8x128xf32>
    %33 = arith.addf %5, %32 : vector<8x128xf32>
    %c128_i32 = arith.constant 128 : i32
    %34 = arith.addi %3, %c128_i32 : i32
    %35 = vector.broadcast %34 : i32 to vector<8x1xi32>
    %36 = arith.subi %7, %35 : vector<8x1xi32>
    %37 = vector.broadcast %36 : vector<8x1xi32> to vector<8x128xi32>
    %38 = arith.cmpi eq, %4, %37 : vector<8x128xi32>
    %cst_15 = arith.constant 0.899999976 : f32
    %39 = vector.broadcast %cst_15 : f32 to vector<8x128xf32>
    %40 = vector.shape_cast %12 : vector<8x1xf32> to vector<8x1xf32>
    %41 = vector.broadcast %40 : vector<8x1xf32> to vector<8x128xf32>
    %42 = arith.select %38, %39, %41 : vector<8x128xi1>, vector<8x128xf32>
    %c0_16 = arith.constant 0 : index
    %c0_17 = arith.constant 0 : index
    %c128 = arith.constant 128 : index
    %43 = vector.load %arg4[%c0_16, %c0_17, %c128] : memref<2x8x256xf32, #tpu.memory_space<vmem>>, vector<1x8x128xf32>
    %44 = vector.shape_cast %43 : vector<1x8x128xf32> to vector<8x128xf32>
    %c1_18 = arith.constant 1 : index
    %c0_19 = arith.constant 0 : index
    %c128_20 = arith.constant 128 : index
    %45 = vector.load %arg4[%c1_18, %c0_19, %c128_20] : memref<2x8x256xf32, #tpu.memory_space<vmem>>, vector<1x8x128xf32>
    %46 = vector.shape_cast %45 : vector<1x8x128xf32> to vector<8x128xf32>
    %47 = arith.addf %44, %46 : vector<8x128xf32>
    %48 = arith.mulf %42, %47 : vector<8x128xf32>
    %49 = arith.addf %6, %48 : vector<8x128xf32>
    %c0_21 = arith.constant 0 : index
    %c0_22 = arith.constant 0 : index
    %c0_23 = arith.constant 0 : index
    %c0_24 = arith.constant 0 : index
    %50 = vector.load %arg5[%c0_21, %c0_22, %c0_23, %c0_24] : memref<1x1x8x128xf32, #tpu.memory_space<vmem>>, vector<1x1x8x128xf32>
    %51 = vector.shape_cast %50 : vector<1x1x8x128xf32> to vector<8x128xf32>
    %52 = arith.addf %33, %49 : vector<8x128xf32>
    %53 = arith.addf %51, %52 : vector<8x128xf32>
    %c0_25 = arith.constant 0 : index
    %c0_26 = arith.constant 0 : index
    %c0_27 = arith.constant 0 : index
    %c0_28 = arith.constant 0 : index
    %54 = vector.load %arg5[%c0_25, %c0_26, %c0_27, %c0_28] : memref<1x1x8x128xf32, #tpu.memory_space<vmem>>, vector<1x1x8x128xf32>
    %55 = vector.shape_cast %54 : vector<1x1x8x128xf32> to vector<8x128xf32>
    %56 = vector.shape_cast %53 : vector<8x128xf32> to vector<1x1x8x128xf32>
    tpu.vector_store %arg5[%c0_25, %c0_26, %c0_27, %c0_28], %56 {strides = array<i32>} : memref<1x1x8x128xf32, #tpu.memory_space<vmem>>, vector<1x1x8x128xf32>,
    return
  }
  func.func @transform_0(%arg0: i32, %arg1: i32, %arg2: i32) -> (i32, i32) {
    %c0_i32 = arith.constant 0 : i32
    %c0_i32_0 = arith.constant 0 : i32
    return %arg1, %c0_i32 : i32, i32
  }
  func.func @transform_1(%arg0: i32, %arg1: i32, %arg2: i32) -> (i32, i32, i32) {
    %c0_i32 = arith.constant 0 : i32
    return %arg0, %arg1, %arg2 : i32, i32, i32
  }
  func.func @transform_2(%arg0: i32, %arg1: i32, %arg2: i32) -> (i32, i32, i32, i32) {
    %c0_i32 = arith.constant 0 : i32
    %c0_i32_0 = arith.constant 0 : i32
    %c0_i32_1 = arith.constant 0 : i32
    return %arg0, %arg1, %c0_i32, %c0_i32_0 : i32, i32, i32, i32
  }
}

</mosaic_0001>

<llo_original>
// kernel: tpu_custom_call.1
$region0: #{tpu_custom_call.1}
  #allocation0 [shape = 'u32[]', space=smem, size = 0x4, offset = 0x4, fixed_abs, tag = 'smem constant byte address 0x4 - core index']
  #allocation1 [shape = 'u32[144,128]{1,0:T(1,128)}', space=vmem, size = 0x12000, scoped, tag = 'internal scratch']
  %s0 = inlined_call_operand.vmem [shape: s32[16,1], index: 0, kind: input, shape index: {}]
  %s1 = inlined_call_operand.hbm [shape: f32[2,16,512], index: 1, kind: input, shape index: {}]
  %s2 = inlined_call_operand.hbm [shape: f32[1,2,8,128], index: 2, kind: output, shape index: {}]
  %s3 = sld [smem:[#allocation0]]
  $region49: #{tpu_custom_call.1} parent=0
    _
  %s5 = ssub.s32 1, %s3
  %s6 = scalar_select 0, %s5, %s3
  $region1: #{tpu_custom_call.1} parent=0
    #allocation2 [shape = 'u8[32768]{0}', space=vmem, size = 0x8000, scoped, tag = 'input window, operand 1']
    #allocation3 [shape = 's32[2]{0}', space=sflag, size = 0x8, scoped, tag = 'scoped memory for tpu_custom_call.1']
    #allocation4 [shape = 's32[2]{0}', space=sflag, size = 0x8, scoped, tag = 'scoped memory for tpu_custom_call.1']
    #allocation5 [shape = 'u8[8192]{0}', space=vmem, size = 0x2000, scoped, tag = 'output window, operand 0']
    %7 = vsyncpa [#allocation3], 0
    %s8 = scalar_lea.sflag [#allocation3], 1
    %9 = vsyncpa %s8, 0
    %10 = vsyncpa [#allocation4], 0
    %s11 = scalar_lea.sflag [#allocation4], 1
    %12 = vsyncpa %s11, 0
    loop: start=0, step=1, limit=6
    $region2: #{tpu_custom_call.1} parent=1 // loop_pre_header
      _
    $region3: #{tpu_custom_call.1} parent=1 // loop_header
      %s14 = sphi 0, %s18
      %p15 = scmp.ge.s32.totalorder %s14, 6
      %s21 = sphi 0, %s40
      %s22 = sphi 0, %s36
      %s23 = sphi 0, %s32
      %s24 = sphi 0, %s21
      %s25 = sphi 0, %s22
      %s26 = sphi 0, %s23
      %s27 = sphi 0, %s24
      %s28 = sphi 0, %s25
      %s29 = sphi 0, %s26
      %s43 = sphi 0, %s45
      %s46 = sphi 0, %s43
      %s47 = sphi 0, %s46
      %s63 = sphi 0, %s47
      %s73 = sphi 0, %s75
      %s76 = sphi 0, %s73
      %s77 = sphi 0, %s76
      %s93 = sphi 0, %s77
      %s101 = sphi 0, %s103
      %s104 = sphi 0, %s101
      %s105 = sphi 0, %s104
      %s121 = sphi 0, %s105
    $region4: #{tpu_custom_call.1} parent=1 // loop_header_branch
      %17 = sbr.rel (%p15) target = $region8
    $region5: #{tpu_custom_call.1} parent=1 // loop_body
      %s19 = ssub.s32 %s14, 1
      %s20 = ssub.s32 %s14, 2
      %s30 = sadd.s32 1, %s23
      %p31 = scmp.ge.s32.totalorder %s30, 2
      %s32 = scalar_select %p31, 0, %s30
      %s33 = sadd.s32 1, %s22
      %s34 = scalar_select %p31, %s33, %s22
      %p35 = scmp.ge.s32.totalorder %s34, 2
      %s36 = scalar_select %p35, 0, %s34
      %s37 = sadd.s32 1, %s21
      %s38 = scalar_select %p35, %s37, %s21
      %p39 = scmp.ge.s32.totalorder %s38, 1
      %s40 = scalar_select %p39, 0, %s38
      %s41 = ssub.s32 %s22, %s36
      %p42 = scmp.eq.s32.totalorder %s41, 0
      %s44 = sadd.s32 %s43, 1
      %s45 = scalar_select %p42, %s43, %s44
      %p48 = pneg %p42
      %p49 = scmp.eq.s32.totalorder %s14, 3
      %p50 = por %p48, %p49
      %p51 = scmp.ne.s32.totalorder %s43, %s46
      %p52 = scmp.eq.s32.totalorder %s14, 0
      %p53 = por %p51, %p52
      %p54 = scmp.ne.s32.totalorder %s43, %s46
      %p55 = scmp.eq.s32.totalorder %s19, 3
      %p56 = por %p54, %p55
      %p57 = scmp.ne.s32.totalorder %s46, %s47
      %p58 = scmp.eq.s32.totalorder %s19, 0
      %p59 = por %p57, %p58
      %p60 = scmp.ne.s32.totalorder %s46, %s47
      %p61 = scmp.eq.s32.totalorder %s20, 3
      %p62 = por %p60, %p61
      %p64 = scmp.ne.s32.totalorder %s47, %s63
      %p65 = scmp.eq.s32.totalorder %s20, 0
      %p66 = por %p64, %p65
      %s67 = ssub.s32 %s21, %s40
      %s68 = ssub.s32 %s22, %s36
      %s69 = sor.u32 %s67, %s68
      %s70 = ssub.s32 %s23, %s32
      %s71 = sor.u32 %s69, %s70
      %p72 = scmp.eq.s32.totalorder %s71, 0
      %s74 = sadd.s32 %s73, 1
      %s75 = scalar_select %p72, %s73, %s74
      %p78 = pneg %p72
      %p79 = scmp.eq.s32.totalorder %s14, 3
      %p80 = por %p78, %p79
      %p81 = scmp.ne.s32.totalorder %s73, %s76
      %p82 = scmp.eq.s32.totalorder %s14, 0
      %p83 = por %p81, %p82
      %p84 = scmp.ne.s32.totalorder %s73, %s76
      %p85 = scmp.eq.s32.totalorder %s19, 3
      %p86 = por %p84, %p85
      %p87 = scmp.ne.s32.totalorder %s76, %s77
      %p88 = scmp.eq.s32.totalorder %s19, 0
      %p89 = por %p87, %p88
      %p90 = scmp.ne.s32.totalorder %s76, %s77
      %p91 = scmp.eq.s32.totalorder %s20, 3
      %p92 = por %p90, %p91
      %p94 = scmp.ne.s32.totalorder %s77, %s93
      %p95 = scmp.eq.s32.totalorder %s20, 0
      %p96 = por %p94, %p95
      %s97 = ssub.s32 %s21, %s40
      %s98 = ssub.s32 %s22, %s36
      %s99 = sor.u32 %s97, %s98
      %p100 = scmp.eq.s32.totalorder %s99, 0
      %s102 = sadd.s32 %s101, 1
      %s103 = scalar_select %p100, %s101, %s102
      %p106 = pneg %p100
      %p107 = scmp.eq.s32.totalorder %s14, 3
      %p108 = por %p106, %p107
      %p109 = scmp.ne.s32.totalorder %s101, %s104
      %p110 = scmp.eq.s32.totalorder %s14, 0
      %p111 = por %p109, %p110
      %p112 = scmp.ne.s32.totalorder %s101, %s104
      %p113 = scmp.eq.s32.totalorder %s19, 3
      %p114 = por %p112, %p113
      %p115 = scmp.ne.s32.totalorder %s104, %s105
      %p116 = scmp.eq.s32.totalorder %s19, 0
      %p117 = por %p115, %p116
      %p118 = scmp.ne.s32.totalorder %s104, %s105
      %p119 = scmp.eq.s32.totalorder %s20, 3
      %p120 = por %p118, %p119
      %p122 = scmp.ne.s32.totalorder %s105, %s121
      %p123 = scmp.eq.s32.totalorder %s20, 0
      %p124 = por %p122, %p123
      %p125 = scmp.le.s32.totalorder 1, %s14
      %p126 = scmp.lt.s32.totalorder %s14, 5
      %p127 = pnand %p125, %p126
      %p128 = pneg %p127
      // Predicated region
      $region9: #{tpu_custom_call.1} parent=5 // pred_check
        _
      $region10: #{tpu_custom_call.1} parent=5 // pred_check_branch
        %130 = sbr.rel (%p127) target = $region12
      $region11: #{tpu_custom_call.1} parent=5 // pred_region
        %s131 = ssub.s32 %s14, 1
      $region12: #{tpu_custom_call.1} parent=5 // pred_fallthru
        _
      %p132 = scmp.lt.s32.totalorder %s14, 4
      // Predicated region
      $region13: #{tpu_custom_call.1} parent=5 // pred_check
        %p133 = pneg %p132
      $region14: #{tpu_custom_call.1} parent=5 // pred_check_branch
        %135 = sbr.rel (%p133) target = $region16
      $region15: #{tpu_custom_call.1} parent=5 // pred_region
        // Predicated region
        $region17: #{tpu_custom_call.1} parent=15 // pred_check
          %p136 = pneg %p53
        $region18: #{tpu_custom_call.1} parent=15 // pred_check_branch
          %138 = sbr.rel (%p136) target = $region20
        $region19: #{tpu_custom_call.1} parent=15 // pred_region
          %p139 = scmp.lt.s32.totalorder %s22, 1
          %s140 = scalar_select %p139, %s22, 1
          %s141 = smul.addr %s140, 8
          %s142 = scalar_lea.vmem %s0, %s141
        $region20: #{tpu_custom_call.1} parent=15 // pred_fallthru
          _
        // Predicated region
        $region21: #{tpu_custom_call.1} parent=15 // pred_check
          %p143 = pneg %p83
        $region22: #{tpu_custom_call.1} parent=15 // pred_check_branch
          %145 = sbr.rel (%p143) target = $region24
        $region23: #{tpu_custom_call.1} parent=15 // pred_region
          %s146 = sand.u32 %s73, 1
          %s147 = scalar_lea.sflag [#allocation3], %s146
          %s148 = sand.u32 %s73, 1
          %s149 = smul.addr %s148, 32
          %s150 = scalar_lea.vmem [#allocation2], %s149
          %s151 = smul.u32 2, %s21
          %s152 = smul.u32 2, %s23
          %s154 = ssub.s32 512, 512
          %155 = vsyncadd %s147, %s154
          %s156 = smul.addr %s22, 4
          %s157 = sadd.s32 %s152, %s156
          %s158 = smul.addr %s151, 8
          %s159 = sadd.s32 %s157, %s158
          %s160 = smul.addr %s159, 128
          %s161 = scalar_lea.hbm %s1, %s160
          %s162 = sshll.u32 %s150, 4
          %s163 = int_to_ptr.vmem [resolvable:$true] %s162
          %168 = dma.hbm_to_vmem [thread:$0]  %s161, 512, %s163, %s147, 1024, 256, 16
        $region24: #{tpu_custom_call.1} parent=15 // pred_fallthru
          _
      $region16: #{tpu_custom_call.1} parent=5 // pred_fallthru
        _
      %p169 = scmp.le.s32.totalorder 1, %s14
      %p170 = scmp.lt.s32.totalorder %s14, 5
      %p171 = pnand %p169, %p170
      %p172 = pneg %p171
      // Predicated region
      $region25: #{tpu_custom_call.1} parent=5 // pred_check
        _
      $region26: #{tpu_custom_call.1} parent=5 // pred_check_branch
        %174 = sbr.rel (%p171) target = $region28
      $region27: #{tpu_custom_call.1} parent=5 // pred_region
        %s175 = ssub.s32 %s14, 1
        %s176 = sand.u32 %s76, 1
        %s177 = scalar_lea.sflag [#allocation3], %s176
        %s178 = sand.u32 %s76, 1
        %s179 = smul.addr %s178, 32
        %s180 = scalar_lea.vmem [#allocation2], %s179
        // Predicated region
        $region29: #{tpu_custom_call.1} parent=27 // pred_check
          %p181 = pneg %p89
        $region30: #{tpu_custom_call.1} parent=27 // pred_check_branch
          %183 = sbr.rel (%p181) target = $region32
        $region31: #{tpu_custom_call.1} parent=27 // pred_region
          %184 = dma.done %s177, 512
        $region32: #{tpu_custom_call.1} parent=27 // pred_fallthru
          _
        %p185 = scmp.lt.s32.totalorder %s25, 1
        %s186 = scalar_select %p185, %s25, 1
        %s187 = smul.addr %s186, 8
        %s188 = scalar_lea.vmem %s0, %s187
        %p189 = pneg %p59
        %p190 = pneg %p56
        %s191 = sand.u32 %s76, 1
        %s192 = scalar_lea.sflag [#allocation3], %s191
        %s193 = sand.u32 %s76, 1
        %s194 = smul.addr %s193, 32
        %s195 = scalar_lea.vmem [#allocation2], %s194
        %p196 = pneg %p89
        %p197 = pneg %p86
        %p198 = pneg %p117
        %p199 = pneg %p114
        %s200 = sand.u32 %s104, 1
        %s201 = scalar_lea.sflag [#allocation4], %s200
        %s202 = sand.u32 %s104, 1
        %s203 = smul.addr %s202, 8
        %s204 = scalar_lea.vmem [#allocation5], %s203
        %p205 = scmp.lt.s32.totalorder %s25, 1
        %s206 = scalar_select %p205, %s25, 1
        %s207 = smul.addr %s206, 8
        %s208 = scalar_lea.vmem %s0, %s207
        %s209 = smul.u32 2, %s24
        %s210 = smul.u32 2, %s26
        %p211 = scmp.eq.s32.totalorder %s26, 0
        // Predicated region
        $region33: #{tpu_custom_call.1} parent=27 // pred_check
          %p212 = pneg %p211
        $region34: #{tpu_custom_call.1} parent=27 // pred_check_branch
          %214 = sbr.rel (%p212) target = $region36
        $region35: #{tpu_custom_call.1} parent=27 // pred_region
          %215 = vst [vmem:[%s204] sm:$0xff] 0.0
        $region36: #{tpu_custom_call.1} parent=27 // pred_fallthru
          _
        %s216 = smul.u32 %s26, 256
        %v217 = vlaneseq
        %v218 = vand.u32 %v217, 127
        %v219 = vld [vmem:[%s208] sm:$0xff]
        %vm220 = vcmp.eq.s32.totalorder %v219, 0
        %v221 = vsel %vm220, 0.0, 0.00019607843
        %v222 = vstv %s216
        %v223 = vsub.s32 %v219, %v222
        %224 = vset.pattern.permute.xlu0 0
        %225 = vperm.xlu0 %224, %v223
        %v226 = vpop.permute.xlu0 %225
        %vm227 = vcmp.eq.s32.totalorder %v218, %v226
        %229 = vset.pattern.permute.xlu0 0
        %230 = vperm.xlu0 %229, %v221
        %v231 = vpop.permute.xlu0 %230
        %v233 = vsel %vm227, 0.9, %v231
        %s234 = ssub.s32 0, %s216
        %v235 = vstv %s234
        %vm236 = vcmp.eq.s32.totalorder %v218, %v235
        %v237 = vsel %vm236, 0.0, %v233
        %v238 = vld [vmem:[%s180] sm:$0xff]
        %s239 = scalar_lea.vmem %s180, 16 [#allocation2]
        %v240 = vld [vmem:[%s239] sm:$0xff]
        %v241 = vadd.f32 %v238, %v240
        %v242 = vmul.f32 %v237, %v241
        %v243 = vadd.f32 %v242, 0.0
        %s244 = sadd.s32 %s216, 128
        %v245 = vstv %s244
        %v246 = vsub.s32 %v219, %v245
        %247 = vset.pattern.permute.xlu0 0
        %248 = vperm.xlu0 %247, %v246
        %v249 = vpop.permute.xlu0 %248
        %vm250 = vcmp.eq.s32.totalorder %v218, %v249
        %v251 = vsel %vm250, 0.9, %v231
        %v252 = vld [vmem:[%s180 + $0x8] sm:$0xff]
        %v253 = vld [vmem:[%s239 + $0x8] sm:$0xff]
        %v254 = vadd.f32 %v252, %v253
        %v255 = vmul.f32 %v251, %v254
        %v256 = vadd.f32 %v255, 0.0
        %v257 = vld [vmem:[%s204] sm:$0xff]
        %v258 = vadd.f32 %v243, %v256
        %v259 = vadd.f32 %v257, %v258
        %260 = vst [vmem:[%s204] sm:$0xff] %v259
        %s261 = sand.u32 %s104, 1
        %s262 = scalar_lea.sflag [#allocation4], %s261
        %s263 = sand.u32 %s104, 1
        %s264 = smul.addr %s263, 8
        %s265 = scalar_lea.vmem [#allocation5], %s264
        // Predicated region
        $region37: #{tpu_custom_call.1} parent=27 // pred_check
          %p266 = pneg %p114
        $region38: #{tpu_custom_call.1} parent=27 // pred_check_branch
          %268 = sbr.rel (%p266) target = $region40
        $region39: #{tpu_custom_call.1} parent=27 // pred_region
          %s270 = ssub.s32 128, 128
          %271 = vsyncadd %s262, %s270
          %s272 = smul.addr %s24, 2
          %s273 = sadd.s32 %s25, %s272
          %s274 = smul.addr %s273, 128
          %s275 = scalar_lea.hbm %s2, %s274
          %s277 = sshll.u32 %s265, 4
          %s278 = int_to_ptr.vmem [resolvable:$true] %s277
          %280 = dma.vmem_to_hbm [thread:$0]  %s278, 128, %s275, %s262
        $region40: #{tpu_custom_call.1} parent=27 // pred_fallthru
          _
      $region28: #{tpu_custom_call.1} parent=5 // pred_fallthru
        _
      %p281 = scmp.le.s32.totalorder 2, %s14
      // Predicated region
      $region41: #{tpu_custom_call.1} parent=5 // pred_check
        %p282 = pneg %p281
      $region42: #{tpu_custom_call.1} parent=5 // pred_check_branch
        %284 = sbr.rel (%p282) target = $region44
      $region43: #{tpu_custom_call.1} parent=5 // pred_region
        %s285 = ssub.s32 %s14, 2
        // Predicated region
        $region45: #{tpu_custom_call.1} parent=43 // pred_check
          %p286 = pneg %p120
        $region46: #{tpu_custom_call.1} parent=43 // pred_check_branch
          %288 = sbr.rel (%p286) target = $region48
        $region47: #{tpu_custom_call.1} parent=43 // pred_region
          %s289 = sand.u32 %s105, 1
          %s290 = scalar_lea.sflag [#allocation4], %s289
          %s291 = sand.u32 %s105, 1
          %s292 = smul.addr %s291, 8
          %s293 = scalar_lea.vmem [#allocation5], %s292
          %294 = dma.done %s290, 128
        $region48: #{tpu_custom_call.1} parent=43 // pred_fallthru
          _
      $region44: #{tpu_custom_call.1} parent=5 // pred_fallthru
        _
    $region6: #{tpu_custom_call.1} parent=1 // loop_footer
      %s18 = sadd.s32 1, %s14
    $region7: #{tpu_custom_call.1} parent=1 // loop_footer_branch
      %13 = sbr.rel target = $region3
    $region8: #{tpu_custom_call.1} parent=1 // loop_exit
      _
    %295 = vsyncpa [#allocation3], 1
    %s296 = scalar_lea.sflag [#allocation3], 1
    %297 = vsyncpa %s296, 1
    %298 = vsyncpa [#allocation4], 1
    %s299 = scalar_lea.sflag [#allocation4], 1
    %300 = vsyncpa %s299, 1

</llo_original>
